<compile_context>
chip_gen: v7x
topology: tpu7x:2x2x1
jax: 0.10.0
libtpu: 0.0.40
codegen_flags: <defaults>
</compile_context>

<pallas_src>
import jax
import jax.numpy as jnp
from jax.experimental import pallas as pl
from jax.experimental.pallas import tpu as pltpu


def _round_up(x, m):
    return (x + m - 1) // m * m


def _linear_relu_kernel(x_ref, wt_ref, b_ref, o_ref):
    # h0 = relu(x @ W.T + b); compute/accumulate in f32, emit compute dtype.
    h = jnp.dot(x_ref[...], wt_ref[...], preferred_element_type=jnp.float32)
    h = jnp.maximum(h + b_ref[...], 0.0)
    o_ref[...] = h.astype(o_ref.dtype)


def _prop_kernel(g_ref, h_ref, o_ref, acc_ref):
    # One step of h <- g @ h, tiled over (row, emb, reduction) grid.
    kk = pl.program_id(2)

    @pl.when(kk == 0)
    def _():
        acc_ref[...] = jnp.zeros_like(acc_ref)

    acc_ref[...] += jnp.dot(
        g_ref[...], h_ref[...], preferred_element_type=jnp.float32
    )

    @pl.when(kk == pl.num_programs(2) - 1)
    def _():
        o_ref[...] = acc_ref[...].astype(o_ref.dtype)


def sgc_forward(g, x, w, b, *, k, compute_dtype=jnp.bfloat16,
                tile_m=None, tile_n=None, tile_k=None):
    """Dense SGC forward. g:[N,N], x:[N,in_dim], w:[emb,in_dim], b:[emb]."""
    n, in_dim = x.shape
    emb_dim = w.shape[0]

    # Lane-dense emb padding + tileable N padding.
    e_pad = _round_up(emb_dim, 128)
    n_pad = _round_up(n, 128)

    def pick(dim, override):
        if override is not None:
            assert dim % override == 0, (dim, override)
            return override
        for t in (512, 384, 256, 128):
            if dim % t == 0:
                return t
        return 128

    tm = pick(n_pad, tile_m)
    tk = pick(n_pad, tile_k)
    tn = pick(e_pad, tile_n)

    f32 = jnp.float32
    # Zero padding keeps real rows exact: padded g rows/cols are zero, padded
    # emb columns of W/b are zero, so padded contributions vanish.
    g_p = jnp.zeros((n_pad, n_pad), f32).at[:n, :n].set(g.astype(f32))
    x_p = jnp.zeros((n_pad, in_dim), f32).at[:n, :].set(x.astype(f32))
    wt_p = jnp.zeros((in_dim, e_pad), f32).at[:, :emb_dim].set(w.astype(f32).T)
    b_p = jnp.zeros((1, e_pad), f32).at[0, :emb_dim].set(b.astype(f32))

    # g is the dominant HBM byte stream: ship it (and h) to the MXU in bf16.
    g_c = g_p.astype(compute_dtype)

    # ---- stage 1: h0 = relu(x @ W.T + b), row-tiled tiny kernel ----------
    h = pl.pallas_call(
        _linear_relu_kernel,
        out_shape=jax.ShapeDtypeStruct((n_pad, e_pad), compute_dtype),
        grid=(n_pad // tm,),
        in_specs=[
            pl.BlockSpec((tm, in_dim), lambda i: (i, 0)),
            pl.BlockSpec((in_dim, e_pad), lambda i: (0, 0)),
            pl.BlockSpec((1, e_pad), lambda i: (0, 0)),
        ],
        out_specs=pl.BlockSpec((tm, e_pad), lambda i: (i, 0)),
        compiler_params=pltpu.CompilerParams(
            dimension_semantics=("parallel",)),
    )(x_p, wt_p, b_p)

    # ---- stage 2: k tiled propagation passes, h ping-pongs through HBM ---
    itemsize = jnp.dtype(compute_dtype).itemsize
    cost = pl.CostEstimate(
        flops=2 * n_pad * n_pad * e_pad,
        transcendentals=0,
        bytes_accessed=(n_pad * n_pad + 2 * n_pad * e_pad) * itemsize,
    )

    prop = pl.pallas_call(
        _prop_kernel,
        out_shape=jax.ShapeDtypeStruct((n_pad, e_pad), compute_dtype),
        grid=(n_pad // tm, e_pad // tn, n_pad // tk),
        in_specs=[
            pl.BlockSpec((tm, tk), lambda i, j, kk: (i, kk)),
            pl.BlockSpec((tk, tn), lambda i, j, kk: (kk, j)),
        ],
        out_specs=pl.BlockSpec((tm, tn), lambda i, j, kk: (i, j)),
        scratch_shapes=[pltpu.VMEM((tm, tn), jnp.float32)],
        compiler_params=pltpu.CompilerParams(
            dimension_semantics=("parallel", "parallel", "arbitrary"),
            vmem_limit_bytes=48 << 20,  # fits v7x's 64 MiB, headroom on v5e/v6e
        ),
        cost_estimate=cost,
    )

    for _ in range(k):
        h = prop(g_c, h)

    return h[:n, :emb_dim].astype(jnp.float32)


if __name__ == "__main__":
    # Small shapes consistent with the module; N chosen so the tiled grid has
    # multiple row and reduction steps with 128-wide tiles.
    N = 256         # number of graph nodes
    IN_DIM = 8      # input feature dim
    EMB_DIM = 32    # embedding dim
    K = 2           # nlayers (propagation steps)

    key = jax.random.PRNGKey(0)
    k_g, k_x, k_w, k_b = jax.random.split(key, 4)

    # Dense propagation matrix (row-normalized random adjacency + self loops).
    adj = (jax.random.uniform(k_g, (N, N)) > 0.5).astype(jnp.float32)
    adj = adj + jnp.eye(N, dtype=jnp.float32)
    g = adj / jnp.sum(adj, axis=1, keepdims=True)

    x = jax.random.normal(k_x, (N, IN_DIM), dtype=jnp.float32)
    w = jax.random.normal(k_w, (EMB_DIM, IN_DIM), dtype=jnp.float32) * 0.1
    b = jax.random.normal(k_b, (EMB_DIM,), dtype=jnp.float32) * 0.1

    out = sgc_forward(g, x, w, b, k=K, tile_m=128, tile_n=128, tile_k=128)
    out = jax.block_until_ready(out)
    assert out.shape == (N, EMB_DIM)

    # Pure-JAX reference with the same bf16 MXU-input casts / f32 accumulation.
    h_ref = jnp.maximum(x @ w.T + b, 0.0).astype(jnp.bfloat16)
    g_bf = g.astype(jnp.bfloat16)
    for _ in range(K):
        h_ref = jnp.dot(
            g_bf, h_ref, preferred_element_type=jnp.float32
        ).astype(jnp.bfloat16)
    ref = h_ref.astype(jnp.float32)

    max_err = float(jnp.max(jnp.abs(out - ref)))
    assert jnp.allclose(out, ref, atol=2e-2, rtol=2e-2), max_err

    print("KERNEL_OK")
</pallas_src>

<mosaic_0001>
module attributes {stable_mosaic.version = 11 : i64} {
  func.func @_linear_relu_kernel(%arg0: i32, %arg1: memref<128x8xf32, #tpu.memory_space<vmem>>, %arg2: memref<8x128xf32, #tpu.memory_space<vmem>>, %arg3: memref<1x128xf32, #tpu.memory_space<vmem>>, %arg4: memref<128x128xbf16, #tpu.memory_space<vmem>>) attributes {dimension_semantics = [#tpu.dimension_semantics<parallel>], iteration_bounds = array<i64: 2>, scalar_prefetch = 0 : i64, scratch_operands = 0 : i64, tpu.core_type = #tpu.core_type<tc>, window_params = [{transform_indices = @transform_0, window_bounds = array<i64: 128, 8>}, {pipeline_mode = #tpu.pipeline_mode<synchronous>, transform_indices = @transform_1, window_bounds = array<i64: 8, 128>}, {pipeline_mode = #tpu.pipeline_mode<synchronous>, transform_indices = @transform_2, window_bounds = array<i64: 1, 128>}, {transform_indices = @transform_3, window_bounds = array<i64: 128, 128>}]} {
    %c0 = arith.constant 0 : index
    %c0_0 = arith.constant 0 : index
    %0 = vector.load %arg1[%c0, %c0_0] : memref<128x8xf32, #tpu.memory_space<vmem>>, vector<128x8xf32>
    %c0_1 = arith.constant 0 : index
    %c0_2 = arith.constant 0 : index
    %1 = vector.load %arg2[%c0_1, %c0_2] : memref<8x128xf32, #tpu.memory_space<vmem>>, vector<8x128xf32>
    %cst = arith.constant dense<0.000000e+00> : vector<128x128xf32>
    %2 = tpu.matmul %0, %1, %cst {dimension_numbers = #tpu.dot_dimension_numbers<[1], [0], [0], [1], [0, 0, 1, 1], [], []>} : vector<128x8xf32>, vector<8x128xf32>, vector<128x128xf32> -> vector<128x128xf32>
    %c0_3 = arith.constant 0 : index
    %c0_4 = arith.constant 0 : index
    %3 = vector.load %arg3[%c0_3, %c0_4] : memref<1x128xf32, #tpu.memory_space<vmem>>, vector<1x128xf32>
    %4 = vector.broadcast %3 : vector<1x128xf32> to vector<128x128xf32>
    %5 = arith.addf %2, %4 : vector<128x128xf32>
    %cst_5 = arith.constant 0.000000e+00 : f32
    %6 = vector.broadcast %cst_5 : f32 to vector<128x128xf32>
    %7 = arith.maximumf %5, %6 : vector<128x128xf32>
    %8 = arith.truncf %7 : vector<128x128xf32> to vector<128x128xbf16>
    %c0_6 = arith.constant 0 : index
    %c0_7 = arith.constant 0 : index
    %9 = vector.load %arg4[%c0_6, %c0_7] : memref<128x128xbf16, #tpu.memory_space<vmem>>, vector<128x128xbf16>
    tpu.vector_store %arg4[%c0_6, %c0_7], %8 {strides = array<i32>} : memref<128x128xbf16, #tpu.memory_space<vmem>>, vector<128x128xbf16>,
    return
  }
  func.func @transform_0(%arg0: i32) -> (i32, i32) {
    %c0_i32 = arith.constant 0 : i32
    %c0_i32_0 = arith.constant 0 : i32
    return %arg0, %c0_i32 : i32, i32
  }
  func.func @transform_1(%arg0: i32) -> (i32, i32) {
    %c0_i32 = arith.constant 0 : i32
    %c0_i32_0 = arith.constant 0 : i32
    %c0_i32_1 = arith.constant 0 : i32
    return %c0_i32, %c0_i32_0 : i32, i32
  }
  func.func @transform_2(%arg0: i32) -> (i32, i32) {
    %c0_i32 = arith.constant 0 : i32
    %c0_i32_0 = arith.constant 0 : i32
    %c0_i32_1 = arith.constant 0 : i32
    return %c0_i32, %c0_i32_0 : i32, i32
  }
  func.func @transform_3(%arg0: i32) -> (i32, i32) {
    %c0_i32 = arith.constant 0 : i32
    %c0_i32_0 = arith.constant 0 : i32
    return %arg0, %c0_i32 : i32, i32
  }
}

</mosaic_0001>

<llo_original>
// kernel: tpu_custom_call.1
$region0: #{tpu_custom_call.1}
  #allocation0 [shape = 'u32[]', space=smem, size = 0x4, offset = 0x4, fixed_abs, tag = 'smem constant byte address 0x4 - core index']
  #allocation1 [shape = 'u32[144,128]{1,0:T(1,128)}', space=vmem, size = 0x12000, scoped, tag = 'internal scratch']
  %s0 = inlined_call_operand.vmem [shape: f32[256,8], index: 0, kind: input, shape index: {}]
  %s1 = inlined_call_operand.vmem [shape: f32[8,128], index: 1, kind: input, shape index: {}]
  %s2 = inlined_call_operand.vmem [shape: f32[1,128], index: 2, kind: input, shape index: {}]
  %s3 = inlined_call_operand.hbm [shape: bf16[256,128], index: 3, kind: output, shape index: {}]
  %s4 = sld [smem:[#allocation0]]
  $region45: #{tpu_custom_call.1} parent=0
    _
  %s6 = ssub.s32 1, %s4
  %s7 = scalar_select 0, %s6, %s4
  $region1: #{tpu_custom_call.1} parent=0
    #allocation2 [shape = 'u8[65536]{0}', space=vmem, size = 0x10000, scoped, tag = 'output window, operand 0']
    #allocation3 [shape = 's32[2]{0}', space=sflag, size = 0x8, scoped, tag = 'scoped memory for tpu_custom_call.1']
    %8 = vsyncpa [#allocation3], 0
    %s9 = scalar_lea.sflag [#allocation3], 1
    %10 = vsyncpa %s9, 0
    loop: start=0, step=1, limit=4
    $region2: #{tpu_custom_call.1} parent=1 // loop_pre_header
      _
    $region3: #{tpu_custom_call.1} parent=1 // loop_header
      %s12 = sphi 0, %s16
      %p13 = scmp.ge.s32.totalorder %s12, 4
      %s22 = sphi 0, %s24
      %s25 = sphi 0, %s22
      %s26 = sphi 0, %s25
      %s42 = sphi 0, %s26
      %s46 = sphi 0, %s46
      %s48 = sphi 0, %s46
      %s49 = sphi 0, %s48
      %s63 = sphi 0, %s49
      %s67 = sphi 0, %s67
      %s69 = sphi 0, %s67
      %s70 = sphi 0, %s69
      %s84 = sphi 0, %s70
      %s90 = sphi 0, %s92
      %s93 = sphi 0, %s90
      %s94 = sphi 0, %s93
      %s110 = sphi 0, %s94
    $region4: #{tpu_custom_call.1} parent=1 // loop_header_branch
      %15 = sbr.rel (%p13) target = $region8
    $region5: #{tpu_custom_call.1} parent=1 // loop_body
      %s17 = ssub.s32 %s12, 1
      %s18 = ssub.s32 %s12, 2
      %s19 = sadd.s32 %s12, 1
      %s20 = ssub.s32 %s12, %s19
      %p21 = scmp.eq.s32.totalorder %s20, 0
      %s23 = sadd.s32 %s22, 1
      %s24 = scalar_select %p21, %s22, %s23
      %p27 = pneg %p21
      %p28 = scmp.eq.s32.totalorder %s12, 1
      %p29 = por %p27, %p28
      %p30 = scmp.ne.s32.totalorder %s22, %s25
      %p31 = scmp.eq.s32.totalorder %s12, 0
      %p32 = por %p30, %p31
      %p33 = scmp.ne.s32.totalorder %s22, %s25
      %p34 = scmp.eq.s32.totalorder %s17, 1
      %p35 = por %p33, %p34
      %p36 = scmp.ne.s32.totalorder %s25, %s26
      %p37 = scmp.eq.s32.totalorder %s17, 0
      %p38 = por %p36, %p37
      %p39 = scmp.ne.s32.totalorder %s25, %s26
      %p40 = scmp.eq.s32.totalorder %s18, 1
      %p41 = por %p39, %p40
      %p43 = scmp.ne.s32.totalorder %s26, %s42
      %p44 = scmp.eq.s32.totalorder %s18, 0
      %p45 = por %p43, %p44
      %s47 = sadd.s32 %s46, 1
      %p50 = scmp.eq.s32.totalorder %s12, 1
      %p51 = scmp.ne.s32.totalorder %s46, %s48
      %p52 = scmp.eq.s32.totalorder %s12, 0
      %p53 = por %p51, %p52
      %p54 = scmp.ne.s32.totalorder %s46, %s48
      %p55 = scmp.eq.s32.totalorder %s17, 1
      %p56 = por %p54, %p55
      %p57 = scmp.ne.s32.totalorder %s48, %s49
      %p58 = scmp.eq.s32.totalorder %s17, 0
      %p59 = por %p57, %p58
      %p60 = scmp.ne.s32.totalorder %s48, %s49
      %p61 = scmp.eq.s32.totalorder %s18, 1
      %p62 = por %p60, %p61
      %p64 = scmp.ne.s32.totalorder %s49, %s63
      %p65 = scmp.eq.s32.totalorder %s18, 0
      %p66 = por %p64, %p65
      %s68 = sadd.s32 %s67, 1
      %p71 = scmp.eq.s32.totalorder %s12, 1
      %p72 = scmp.ne.s32.totalorder %s67, %s69
      %p73 = scmp.eq.s32.totalorder %s12, 0
      %p74 = por %p72, %p73
      %p75 = scmp.ne.s32.totalorder %s67, %s69
      %p76 = scmp.eq.s32.totalorder %s17, 1
      %p77 = por %p75, %p76
      %p78 = scmp.ne.s32.totalorder %s69, %s70
      %p79 = scmp.eq.s32.totalorder %s17, 0
      %p80 = por %p78, %p79
      %p81 = scmp.ne.s32.totalorder %s69, %s70
      %p82 = scmp.eq.s32.totalorder %s18, 1
      %p83 = por %p81, %p82
      %p85 = scmp.ne.s32.totalorder %s70, %s84
      %p86 = scmp.eq.s32.totalorder %s18, 0
      %p87 = por %p85, %p86
      %s88 = ssub.s32 %s12, %s19
      %p89 = scmp.eq.s32.totalorder %s88, 0
      %s91 = sadd.s32 %s90, 1
      %s92 = scalar_select %p89, %s90, %s91
      %p95 = pneg %p89
      %p96 = scmp.eq.s32.totalorder %s12, 1
      %p97 = por %p95, %p96
      %p98 = scmp.ne.s32.totalorder %s90, %s93
      %p99 = scmp.eq.s32.totalorder %s12, 0
      %p100 = por %p98, %p99
      %p101 = scmp.ne.s32.totalorder %s90, %s93
      %p102 = scmp.eq.s32.totalorder %s17, 1
      %p103 = por %p101, %p102
      %p104 = scmp.ne.s32.totalorder %s93, %s94
      %p105 = scmp.eq.s32.totalorder %s17, 0
      %p106 = por %p104, %p105
      %p107 = scmp.ne.s32.totalorder %s93, %s94
      %p108 = scmp.eq.s32.totalorder %s18, 1
      %p109 = por %p107, %p108
      %p111 = scmp.ne.s32.totalorder %s94, %s110
      %p112 = scmp.eq.s32.totalorder %s18, 0
      %p113 = por %p111, %p112
      %p114 = scmp.le.s32.totalorder 1, %s12
      %p115 = scmp.lt.s32.totalorder %s12, 3
      %p116 = pnand %p114, %p115
      %p117 = pneg %p116
      // Predicated region
      $region9: #{tpu_custom_call.1} parent=5 // pred_check
        _
      $region10: #{tpu_custom_call.1} parent=5 // pred_check_branch
        %119 = sbr.rel (%p116) target = $region12
      $region11: #{tpu_custom_call.1} parent=5 // pred_region
        %s120 = ssub.s32 %s12, 1
        // Predicated region
        $region13: #{tpu_custom_call.1} parent=11 // pred_check
          %p121 = pneg %p59
        $region14: #{tpu_custom_call.1} parent=11 // pred_check_branch
          %123 = sbr.rel (%p121) target = $region16
        $region15: #{tpu_custom_call.1} parent=11 // pred_region
          _
        $region16: #{tpu_custom_call.1} parent=11 // pred_fallthru
          _
        // Predicated region
        $region17: #{tpu_custom_call.1} parent=11 // pred_check
          %p124 = pneg %p80
        $region18: #{tpu_custom_call.1} parent=11 // pred_check_branch
          %126 = sbr.rel (%p124) target = $region20
        $region19: #{tpu_custom_call.1} parent=11 // pred_region
          _
        $region20: #{tpu_custom_call.1} parent=11 // pred_fallthru
          _
      $region12: #{tpu_custom_call.1} parent=5 // pred_fallthru
        _
      %p127 = scmp.lt.s32.totalorder %s12, 2
      // Predicated region
      $region21: #{tpu_custom_call.1} parent=5 // pred_check
        %p128 = pneg %p127
      $region22: #{tpu_custom_call.1} parent=5 // pred_check_branch
        %130 = sbr.rel (%p128) target = $region24
      $region23: #{tpu_custom_call.1} parent=5 // pred_region
        // Predicated region
        $region25: #{tpu_custom_call.1} parent=23 // pred_check
          %p131 = pneg %p32
        $region26: #{tpu_custom_call.1} parent=23 // pred_check_branch
          %133 = sbr.rel (%p131) target = $region28
        $region27: #{tpu_custom_call.1} parent=23 // pred_region
          %s134 = smul.u32 16, %s12
          %p135 = scmp.lt.s32.totalorder %s134, 31
          %s136 = scalar_select %p135, %s134, 31
          %s137 = smul.addr %s136, 8
          %s138 = scalar_lea.vmem %s0, %s137
          %s139 = smul.u32 16, %s12
        $region28: #{tpu_custom_call.1} parent=23 // pred_fallthru
          _
      $region24: #{tpu_custom_call.1} parent=5 // pred_fallthru
        _
      %p140 = scmp.le.s32.totalorder 1, %s12
      %p141 = scmp.lt.s32.totalorder %s12, 3
      %p142 = pnand %p140, %p141
      %p143 = pneg %p142
      // Predicated region
      $region29: #{tpu_custom_call.1} parent=5 // pred_check
        _
      $region30: #{tpu_custom_call.1} parent=5 // pred_check_branch
        %145 = sbr.rel (%p142) target = $region32
      $region31: #{tpu_custom_call.1} parent=5 // pred_region
        %s146 = ssub.s32 %s12, 1
        %s147 = smul.u32 16, %s17
        %p148 = scmp.lt.s32.totalorder %s147, 31
        %s149 = scalar_select %p148, %s147, 31
        %s150 = smul.addr %s149, 8
        %s151 = scalar_lea.vmem %s0, %s150
        %p152 = pneg %p38
        %p153 = pneg %p35
        %p154 = pneg %p59
        %p155 = pneg %p56
        %p156 = pneg %p80
        %p157 = pneg %p77
        %p158 = pneg %p106
        %p159 = pneg %p103
        %s160 = sand.u32 %s93, 1
        %s161 = scalar_lea.sflag [#allocation3], %s160
        %s162 = sand.u32 %s93, 1
        %s163 = smul.addr %s162, 64
        %s164 = scalar_lea.vmem [#allocation2], %s163
        %s165 = smul.u32 16, %s17
        %p166 = scmp.lt.s32.totalorder %s165, 31
        %s167 = scalar_select %p166, %s165, 31
        %s168 = smul.addr %s167, 8
        %s169 = scalar_lea.vmem %s0, %s168
        %s170 = smul.u32 16, %s17
        %s171 = smul.u32 16, %s17
        %v172 = vld [vmem:[%s169] sm:$0xff]
        %v173 = vld [vmem:[%s169 + $0x8] sm:$0xff]
        %v174 = vld [vmem:[%s169 + $0x10] sm:$0xff]
        %v175 = vld [vmem:[%s169 + $0x18] sm:$0xff]
        %v176 = vld [vmem:[%s169 + $0x20] sm:$0xff]
        %v177 = vld [vmem:[%s169 + $0x28] sm:$0xff]
        %v178 = vld [vmem:[%s169 + $0x30] sm:$0xff]
        %v179 = vld [vmem:[%s169 + $0x38] sm:$0xff]
        %v180 = vld [vmem:[%s169 + $0x40] sm:$0xff]
        %v181 = vld [vmem:[%s169 + $0x48] sm:$0xff]
        %v182 = vld [vmem:[%s169 + $0x50] sm:$0xff]
        %v183 = vld [vmem:[%s169 + $0x58] sm:$0xff]
        %v184 = vld [vmem:[%s169 + $0x60] sm:$0xff]
        %v185 = vld [vmem:[%s169 + $0x68] sm:$0xff]
        %v186 = vld [vmem:[%s169 + $0x70] sm:$0xff]
        %v187 = vld [vmem:[%s169 + $0x78] sm:$0xff]
        %v188 = vld [vmem:[%s1] sm:$0xff]
        %v189 = vld [vmem:[%s2] sm:$0x1]
        %v191 = vlaneseq
        %v192 = vshrl.u32 %v191, 7
        %v193 = vsub.s32 0, %v192
        %v194 = vrot.slane %v189, %v193
        %vm196 = vcmask 64512
        %v198 = vsel %vm196, %v172, 0
        %v201 = vsel %vm196, %v173, 0
        %v204 = vsel %vm196, %v174, 0
        %v207 = vsel %vm196, %v175, 0
        %v210 = vsel %vm196, %v176, 0
        %v213 = vsel %vm196, %v177, 0
        %v216 = vsel %vm196, %v178, 0
        %v219 = vsel %vm196, %v179, 0
        %v222 = vsel %vm196, %v180, 0
        %v225 = vsel %vm196, %v181, 0
        %v228 = vsel %vm196, %v182, 0
        %v231 = vsel %vm196, %v183, 0
        %v234 = vsel %vm196, %v184, 0
        %v237 = vsel %vm196, %v185, 0
        %v240 = vsel %vm196, %v186, 0
        %v243 = vsel %vm196, %v187, 0
        %245 = vmatprep.subr.mxu0 0.0
        %246 = vmatpush1.msra.mxu0 %v188
        %247 = vmatprep.subr.mxu0 0.0
        %248 = vmatpush1.msra.mxu0 0.0
        %249 = vmatprep.subr.mxu0 0.0
        %250 = vmatpush1.msra.mxu0 0.0
        %251 = vmatprep.subr.mxu0 0.0
        %252 = vmatpush1.msra.mxu0 0.0
        %253 = vmatprep.subr.mxu0 0.0
        %254 = vmatpush1.msra.mxu0 0.0
        %255 = vmatprep.subr.mxu0 0.0
        %256 = vmatpush1.msra.mxu0 0.0
        %257 = vmatprep.subr.mxu0 0.0
        %258 = vmatpush1.msra.mxu0 0.0
        %259 = vmatprep.subr.mxu0 0.0
        %260 = vmatpush1.msra.mxu0 0.0
        %261 = vmatprep.subr.mxu0 0.0
        %262 = vmatpush1.msra.mxu0 0.0
        %263 = vmatprep.subr.mxu0 0.0
        %264 = vmatpush1.msra.mxu0 0.0
        %265 = vmatprep.subr.mxu0 0.0
        %266 = vmatpush1.msra.mxu0 0.0
        %267 = vmatprep.subr.mxu0 0.0
        %268 = vmatpush1.msra.mxu0 0.0
        %269 = vmatprep.subr.mxu0 0.0
        %270 = vmatpush1.msra.mxu0 0.0
        %271 = vmatprep.subr.mxu0 0.0
        %272 = vmatpush1.msra.mxu0 0.0
        %273 = vmatprep.subr.mxu0 0.0
        %274 = vmatpush1.msra.mxu0 0.0
        %275 = vmatprep.subr.mxu0 0.0
        %276 = vmatpush1.msra.mxu0 0.0
        %277 = vmatprep.subr.mxu0 0.0
        %278 = vmatpush1.msra.mxu0 0.0
        %279 = vmatprep.subr.mxu0 0.0
        %280 = vmatpush1.msra.mxu0 0.0
        %281 = vmatprep.subr.mxu0 0.0
        %282 = vmatpush1.msra.mxu0 0.0
        %283 = vmatprep.subr.mxu0 0.0
        %284 = vmatpush1.msra.mxu0 0.0
        %285 = vmatprep.subr.mxu0 0.0
        %286 = vmatpush1.msra.mxu0 0.0
        %287 = vmatprep.subr.mxu0 0.0
        %288 = vmatpush1.msra.mxu0 0.0
        %289 = vmatprep.subr.mxu0 0.0
        %290 = vmatpush1.msra.mxu0 0.0
        %291 = vmatprep.subr.mxu0 0.0
        %292 = vmatpush1.msra.mxu0 0.0
        %293 = vmatprep.subr.mxu0 0.0
        %294 = vmatpush1.msra.mxu0 0.0
        %295 = vmatprep.subr.mxu0 0.0
        %296 = vmatpush1.msra.mxu0 0.0
        %297 = vmatprep.subr.mxu0 0.0
        %298 = vmatpush1.msra.mxu0 0.0
        %299 = vmatprep.subr.mxu0 0.0
        %300 = vmatpush1.msra.mxu0 0.0
        %301 = vmatprep.subr.mxu0 0.0
        %302 = vmatpush1.msra.mxu0 0.0
        %303 = vmatprep.subr.mxu0 0.0
        %304 = vmatpush1.msra.mxu0 0.0
        %305 = vmatprep.subr.mxu0 0.0
        %306 = vmatpush1.msra.mxu0 0.0
        %307 = vmatprep.subr.mxu0 0.0
        %308 = vmatpush1.msra.mxu0 0.0
        %309 = vmatprep.mubr.f32.mxu0 0.0
        %310 = vmatmul.mubr.f32.gmra.mrb[0].mxu0 %v198
        %v311 = vpop.f32.mrb[0].mxu0
        %v312 = vadd.f32 %v194, %v311
        %v313 = vpop.f32.mrb[0].mxu0
        %314 = vmatprep.mubr.f32.mxu0 0.0
        %315 = vmatmul.mubr.f32.gmra.mrb[0].mxu0 %v201
        %v316 = vpop.f32.mrb[0].mxu0
        %v317 = vadd.f32 %v194, %v316
        %v318 = vpop.f32.mrb[0].mxu0
        %319 = vmatprep.mubr.f32.mxu0 0.0
        %320 = vmatmul.mubr.f32.gmra.mrb[0].mxu0 %v204
        %v321 = vpop.f32.mrb[0].mxu0
        %v322 = vadd.f32 %v194, %v321
        %v323 = vpop.f32.mrb[0].mxu0
        %324 = vmatprep.mubr.f32.mxu0 0.0
        %325 = vmatmul.mubr.f32.gmra.mrb[0].mxu0 %v207
        %v326 = vpop.f32.mrb[0].mxu0
        %v327 = vadd.f32 %v194, %v326
        %v328 = vpop.f32.mrb[0].mxu0
        %329 = vmatprep.mubr.f32.mxu0 0.0
        %330 = vmatmul.mubr.f32.gmra.mrb[0].mxu0 %v210
        %v331 = vpop.f32.mrb[0].mxu0
        %v332 = vadd.f32 %v194, %v331
        %v333 = vpop.f32.mrb[0].mxu0
        %334 = vmatprep.mubr.f32.mxu0 0.0
        %335 = vmatmul.mubr.f32.gmra.mrb[0].mxu0 %v213
        %v336 = vpop.f32.mrb[0].mxu0
        %v337 = vadd.f32 %v194, %v336
        %v338 = vpop.f32.mrb[0].mxu0
        %339 = vmatprep.mubr.f32.mxu0 0.0
        %340 = vmatmul.mubr.f32.gmra.mrb[0].mxu0 %v216
        %v341 = vpop.f32.mrb[0].mxu0
        %v342 = vadd.f32 %v194, %v341
        %v343 = vpop.f32.mrb[0].mxu0
        %344 = vmatprep.mubr.f32.mxu0 0.0
        %345 = vmatmul.mubr.f32.gmra.mrb[0].mxu0 %v219
        %v346 = vpop.f32.mrb[0].mxu0
        %v347 = vadd.f32 %v194, %v346
        %v348 = vpop.f32.mrb[0].mxu0
        %349 = vmatprep.mubr.f32.mxu0 0.0
        %350 = vmatmul.mubr.f32.gmra.mrb[0].mxu0 %v222
        %v351 = vpop.f32.mrb[0].mxu0
        %v352 = vadd.f32 %v194, %v351
        %v353 = vpop.f32.mrb[0].mxu0
        %354 = vmatprep.mubr.f32.mxu0 0.0
        %355 = vmatmul.mubr.f32.gmra.mrb[0].mxu0 %v225
        %v356 = vpop.f32.mrb[0].mxu0
        %v357 = vadd.f32 %v194, %v356
        %v358 = vpop.f32.mrb[0].mxu0
        %359 = vmatprep.mubr.f32.mxu0 0.0
        %360 = vmatmul.mubr.f32.gmra.mrb[0].mxu0 %v228
        %v361 = vpop.f32.mrb[0].mxu0
        %v362 = vadd.f32 %v194, %v361
        %v363 = vpop.f32.mrb[0].mxu0
        %364 = vmatprep.mubr.f32.mxu0 0.0
        %365 = vmatmul.mubr.f32.gmra.mrb[0].mxu0 %v231
        %v366 = vpop.f32.mrb[0].mxu0
        %v367 = vadd.f32 %v194, %v366
        %v368 = vpop.f32.mrb[0].mxu0
        %369 = vmatprep.mubr.f32.mxu0 0.0
        %370 = vmatmul.mubr.f32.gmra.mrb[0].mxu0 %v234
        %v371 = vpop.f32.mrb[0].mxu0
        %v372 = vadd.f32 %v194, %v371
        %v373 = vpop.f32.mrb[0].mxu0
        %374 = vmatprep.mubr.f32.mxu0 0.0
        %375 = vmatmul.mubr.f32.gmra.mrb[0].mxu0 %v237
        %v376 = vpop.f32.mrb[0].mxu0
        %v377 = vadd.f32 %v194, %v376
        %v378 = vpop.f32.mrb[0].mxu0
        %379 = vmatprep.mubr.f32.mxu0 0.0
        %380 = vmatmul.mubr.f32.gmra.mrb[0].mxu0 %v240
        %v381 = vpop.f32.mrb[0].mxu0
        %v382 = vadd.f32 %v194, %v381
        %v383 = vpop.f32.mrb[0].mxu0
        %384 = vmatprep.mubr.f32.mxu0 0.0
        %385 = vmatmul.mubr.f32.gmra.mrb[0].mxu0 %v243
        %v386 = vpop.f32.mrb[0].mxu0
        %v387 = vadd.f32 %v194, %v386
        %v388 = vpop.f32.mrb[0].mxu0
        %389 = vdwg.mxu0
        %v390 = vmax.f32 %v312, 0.0
        %v391 = vmax.f32 %v317, 0.0
        %v392 = vmax.f32 %v322, 0.0
        %v393 = vmax.f32 %v327, 0.0
        %v394 = vmax.f32 %v332, 0.0
        %v395 = vmax.f32 %v337, 0.0
        %v396 = vmax.f32 %v342, 0.0
        %v397 = vmax.f32 %v347, 0.0
        %v398 = vmax.f32 %v352, 0.0
        %v399 = vmax.f32 %v357, 0.0
        %v400 = vmax.f32 %v362, 0.0
        %v401 = vmax.f32 %v367, 0.0
        %v402 = vmax.f32 %v372, 0.0
        %v403 = vmax.f32 %v377, 0.0
        %v404 = vmax.f32 %v382, 0.0
        %v405 = vmax.f32 %v387, 0.0
        %v406 = vpack.c.bf16 %v391, %v390
        %v407 = vpack.c.bf16 %v393, %v392
        %v408 = vpack.c.bf16 %v395, %v394
        %v409 = vpack.c.bf16 %v397, %v396
        %v410 = vpack.c.bf16 %v399, %v398
        %v411 = vpack.c.bf16 %v401, %v400
        %v412 = vpack.c.bf16 %v403, %v402
        %v413 = vpack.c.bf16 %v405, %v404
        %v422 = vunpack.c.l.b16 %v406
        %v423 = vunpack.c.h.b16 %v406
        %v424 = vunpack.c.l.b16 %v407
        %v425 = vunpack.c.h.b16 %v407
        %v426 = vunpack.c.l.b16 %v408
        %v427 = vunpack.c.h.b16 %v408
        %v428 = vunpack.c.l.b16 %v409
        %v429 = vunpack.c.h.b16 %v409
        %v430 = vunpack.c.l.b16 %v410
        %v431 = vunpack.c.h.b16 %v410
        %v432 = vunpack.c.l.b16 %v411
        %v433 = vunpack.c.h.b16 %v411
        %v434 = vunpack.c.l.b16 %v412
        %v435 = vunpack.c.h.b16 %v412
        %v436 = vunpack.c.l.b16 %v413
        %v437 = vunpack.c.h.b16 %v413
        %v438 = vpack.c.b16 %v422, %v422
        %v439 = vpack.c.b16 %v423, %v423
        %v440 = vpack.c.b16 %v424, %v424
        %v441 = vpack.c.b16 %v425, %v425
        %v442 = vpack.c.b16 %v426, %v426
        %v443 = vpack.c.b16 %v427, %v427
        %v444 = vpack.c.b16 %v428, %v428
        %v445 = vpack.c.b16 %v429, %v429
        %v446 = vpack.c.b16 %v430, %v430
        %v447 = vpack.c.b16 %v431, %v431
        %v448 = vpack.c.b16 %v432, %v432
        %v449 = vpack.c.b16 %v433, %v433
        %v450 = vpack.c.b16 %v434, %v434
        %v451 = vpack.c.b16 %v435, %v435
        %v452 = vpack.c.b16 %v436, %v436
        %v453 = vpack.c.b16 %v437, %v437
        %470 = vst [vmem:[%s164] sm:$0xf] %v438
        %471 = vst [vmem:[%s164 + $0x4] sm:$0xf] %v439
        %472 = vst [vmem:[%s164 + $0x8] sm:$0xf] %v440
        %473 = vst [vmem:[%s164 + $0xc] sm:$0xf] %v441
        %474 = vst [vmem:[%s164 + $0x10] sm:$0xf] %v442
        %475 = vst [vmem:[%s164 + $0x14] sm:$0xf] %v443
        %476 = vst [vmem:[%s164 + $0x18] sm:$0xf] %v444
        %477 = vst [vmem:[%s164 + $0x1c] sm:$0xf] %v445
        %478 = vst [vmem:[%s164 + $0x20] sm:$0xf] %v446
        %479 = vst [vmem:[%s164 + $0x24] sm:$0xf] %v447
        %480 = vst [vmem:[%s164 + $0x28] sm:$0xf] %v448
        %481 = vst [vmem:[%s164 + $0x2c] sm:$0xf] %v449
        %482 = vst [vmem:[%s164 + $0x30] sm:$0xf] %v450
        %483 = vst [vmem:[%s164 + $0x34] sm:$0xf] %v451
        %484 = vst [vmem:[%s164 + $0x38] sm:$0xf] %v452
        %485 = vst [vmem:[%s164 + $0x3c] sm:$0xf] %v453
        %s486 = sand.u32 %s93, 1
        %s487 = scalar_lea.sflag [#allocation3], %s486
        %s488 = sand.u32 %s93, 1
        %s489 = smul.addr %s488, 64
        %s490 = scalar_lea.vmem [#allocation2], %s489
        // Predicated region
        $region33: #{tpu_custom_call.1} parent=31 // pred_check
          %p491 = pneg %p103
        $region34: #{tpu_custom_call.1} parent=31 // pred_check_branch
          %493 = sbr.rel (%p491) target = $region36
        $region35: #{tpu_custom_call.1} parent=31 // pred_region
          %s494 = smul.u32 16, %s17
          %s496 = ssub.s32 1024, 1024
          %497 = vsyncadd %s487, %s496
          %s498 = smul.addr %s494, 64
          %s499 = scalar_lea.hbm %s3, %s498
          %s500 = sshll.u32 %s490, 4
          %s501 = int_to_ptr.vmem [resolvable:$true] %s500
          %506 = dma.vmem_to_hbm [thread:$0]  %s501, 1024, %s499, %s487, 64, 64, 4
        $region36: #{tpu_custom_call.1} parent=31 // pred_fallthru
          _
      $region32: #{tpu_custom_call.1} parent=5 // pred_fallthru
        _
      %p507 = scmp.le.s32.totalorder 2, %s12
      // Predicated region
      $region37: #{tpu_custom_call.1} parent=5 // pred_check
        %p508 = pneg %p507
      $region38: #{tpu_custom_call.1} parent=5 // pred_check_branch
        %510 = sbr.rel (%p508) target = $region40
      $region39: #{tpu_custom_call.1} parent=5 // pred_region
        %s511 = ssub.s32 %s12, 2
        // Predicated region
        $region41: #{tpu_custom_call.1} parent=39 // pred_check
          %p512 = pneg %p109
        $region42: #{tpu_custom_call.1} parent=39 // pred_check_branch
          %514 = sbr.rel (%p512) target = $region44
        $region43: #{tpu_custom_call.1} parent=39 // pred_region
          %s515 = sand.u32 %s94, 1
          %s516 = scalar_lea.sflag [#allocation3], %s515
          %s517 = sand.u32 %s94, 1
          %s518 = smul.addr %s517, 64
          %s519 = scalar_lea.vmem [#allocation2], %s518
          %520 = dma.done %s516, 1024
        $region44: #{tpu_custom_call.1} parent=39 // pred_fallthru
          _
      $region40: #{tpu_custom_call.1} parent=5 // pred_fallthru
        _
    $region6: #{tpu_custom_call.1} parent=1 // loop_footer
      %s16 = sadd.s32 1, %s12
    $region7: #{tpu_custom_call.1} parent=1 // loop_footer_branch
      %11 = sbr.rel target = $region3
    $region8: #{tpu_custom_call.1} parent=1 // loop_exit
      _
    %521 = vsyncpa [#allocation3], 1
    %s522 = scalar_lea.sflag [#allocation3], 1
    %523 = vsyncpa %s522, 1

</llo_original>
